<compile_context>
chip_gen: v7x
topology: tpu7x:2x2x1
jax: 0.10.0
libtpu: 0.0.40
codegen_flags: <defaults>
</compile_context>

<pallas_src>
import functools

import jax
import jax.numpy as jnp
from jax.experimental import pallas as pl
from jax.experimental.pallas import tpu as pltpu

LANES = 128
SUBLANES = 8


def _aggregation_loss_kernel(x_ref, out_ref, acc_ref, *, n_valid):
    """Accumulate sum((x - 1)^2) in a VMEM vector accumulator; emit mean at end."""
    i = pl.program_id(0)

    @pl.when(i == 0)
    def _():
        acc_ref[...] = jnp.zeros_like(acc_ref)

    x = x_ref[...].astype(jnp.float32)
    d = x - 1.0
    # Pure VPU accumulation; no cross-lane reduce / scalar RMW in the hot loop.
    acc_ref[...] += d * d

    @pl.when(i == pl.num_programs(0) - 1)
    def _():
        out_ref[0, 0] = jnp.sum(acc_ref[...]) / jnp.float32(n_valid)


def aggregation_loss(mask, *, tile_rows=2048):
    """AggregationLoss forward: mean((mask - 1)^2); `mask` is any-shape float array."""
    n = int(mask.size)
    x = mask.reshape(-1)  # row-major flatten; free for contiguous input

    # Lane-dense tile: multiple of 8 sublanes, never larger than the data.
    rows = pl.cdiv(n, LANES)
    tr = min(int(tile_rows), rows)
    tr = max(SUBLANES, (tr // SUBLANES) * SUBLANES)
    chunk = tr * LANES

    # Pad (only if the flat size is not already a multiple of the chunk) with 1.0:
    # padded elements contribute exactly zero squared error, so no validity mask
    # or extra input stream is ever needed.
    padded = pl.cdiv(n, chunk) * chunk
    pad = padded - n
    if pad:
        # TODO(synk): for huge, misaligned inputs an in-kernel iota tail mask on
        # the last grid step would avoid this (rare) concatenate copy entirely.
        x = jnp.concatenate([x, jnp.ones((pad,), x.dtype)])
    x = x.reshape(padded // LANES, LANES)

    grid = (padded // chunk,)
    kernel = functools.partial(_aggregation_loss_kernel, n_valid=n)

    # VMEM budget: 2 (double-buffer) x tr*128*4 B input + tr*128*4 B accumulator
    # -> 3 MiB at tr=2048; fits the default scoped VMEM on v5e/v6e/v7x.
    out = pl.pallas_call(
        kernel,
        out_shape=jax.ShapeDtypeStruct((1, 1), jnp.float32),
        grid_spec=pltpu.PrefetchScalarGridSpec(
            num_scalar_prefetch=0,
            grid=grid,
            in_specs=[pl.BlockSpec((tr, LANES), lambda i: (i, 0))],
            out_specs=pl.BlockSpec(memory_space=pltpu.MemorySpace.SMEM),
            scratch_shapes=[pltpu.VMEM((tr, LANES), jnp.float32)],
        ),
        compiler_params=pltpu.CompilerParams(
            dimension_semantics=("arbitrary",)),
    )(x)
    return out[0, 0]


def _reference_aggregation_loss(mask):
    """Pure-JAX reference mirroring torch.nn.functional.mse_loss(mask, ones)."""
    m = mask.astype(jnp.float32)
    return jnp.mean((m - 1.0) ** 2)


if __name__ == "__main__":
    key = jax.random.PRNGKey(0)

    N, C, H, W = 2, 4, 16, 16
    # Soft mask with values in [0, 1], as the module's docstring describes.
    mask = jax.random.uniform(key, (N, C, H, W), dtype=jnp.float32)

    out = aggregation_loss(mask)
    out = jax.block_until_ready(out)

    ref = _reference_aggregation_loss(mask)
    assert jnp.allclose(out, ref, rtol=1e-5, atol=1e-5), (out, ref)

    print("KERNEL_OK")
</pallas_src>

<mosaic_0001>
module attributes {stable_mosaic.version = 11 : i64} {
  func.func @_aggregation_loss_kernel(%arg0: i32, %arg1: memref<16x128xf32, #tpu.memory_space<vmem>>, %arg2: memref<1x1xf32, #tpu.memory_space<smem>>, %arg3: memref<16x128xf32, #tpu.memory_space<vmem>>) attributes {dimension_semantics = [#tpu.dimension_semantics<arbitrary>], iteration_bounds = array<i64: 1>, scalar_prefetch = 0 : i64, scratch_operands = 1 : i64, tpu.core_type = #tpu.core_type<tc>, window_params = [{transform_indices = @transform_0, window_bounds = array<i64: 16, 128>}, {transform_indices = @transform_1, window_bounds = array<i64: 1, 1>}]} {
    %c0_i32 = arith.constant 0 : i32
    %0 = arith.cmpi eq, %arg0, %c0_i32 : i32
    %1 = arith.extui %0 : i1 to i32
    %c0_i32_0 = arith.constant 0 : i32
    %2 = arith.cmpi ne, %1, %c0_i32_0 : i32
    scf.if %2 {
      %cst_8 = arith.constant 0.000000e+00 : f32
      %13 = vector.broadcast %cst_8 : f32 to vector<16x128xf32>
      %c0_9 = arith.constant 0 : index
      %c0_10 = arith.constant 0 : index
      %14 = vector.load %arg3[%c0_9, %c0_10] : memref<16x128xf32, #tpu.memory_space<vmem>>, vector<16x128xf32>
      tpu.vector_store %arg3[%c0_9, %c0_10], %13 {strides = array<i32>} : memref<16x128xf32, #tpu.memory_space<vmem>>, vector<16x128xf32>,
    } else {
    }
    %c0 = arith.constant 0 : index
    %c0_1 = arith.constant 0 : index
    %3 = vector.load %arg1[%c0, %c0_1] : memref<16x128xf32, #tpu.memory_space<vmem>>, vector<16x128xf32>
    %cst = arith.constant 1.000000e+00 : f32
    %4 = vector.broadcast %cst : f32 to vector<16x128xf32>
    %5 = arith.subf %3, %4 : vector<16x128xf32>
    %c0_2 = arith.constant 0 : index
    %c0_3 = arith.constant 0 : index
    %6 = vector.load %arg3[%c0_2, %c0_3] : memref<16x128xf32, #tpu.memory_space<vmem>>, vector<16x128xf32>
    %7 = arith.mulf %5, %5 : vector<16x128xf32>
    %8 = arith.addf %6, %7 : vector<16x128xf32>
    %c0_4 = arith.constant 0 : index
    %c0_5 = arith.constant 0 : index
    %9 = vector.load %arg3[%c0_4, %c0_5] : memref<16x128xf32, #tpu.memory_space<vmem>>, vector<16x128xf32>
    tpu.vector_store %arg3[%c0_4, %c0_5], %8 {strides = array<i32>} : memref<16x128xf32, #tpu.memory_space<vmem>>, vector<16x128xf32>,
    %c0_i32_6 = arith.constant 0 : i32
    %10 = arith.cmpi eq, %arg0, %c0_i32_6 : i32
    %11 = arith.extui %10 : i1 to i32
    %c0_i32_7 = arith.constant 0 : i32
    %12 = arith.cmpi ne, %11, %c0_i32_7 : i32
    scf.if %12 {
      %c0_8 = arith.constant 0 : index
      %c0_9 = arith.constant 0 : index
      %13 = vector.load %arg3[%c0_8, %c0_9] : memref<16x128xf32, #tpu.memory_space<vmem>>, vector<16x128xf32>
      %14 = vector.shape_cast %13 : vector<16x128xf32> to vector<1x16x128xf32>
      %cst_10 = arith.constant dense<0.000000e+00> : vector<1xf32>
      %15 = vector.multi_reduction <add>, %14, %cst_10 [1, 2] : vector<1x16x128xf32> to vector<1xf32>
      %16 = vector.shape_cast %15 : vector<1xf32> to vector<1x1x1xf32>
      %17 = vector.extract %16[0, 0, 0] : f32 from vector<1x1x1xf32>
      %cst_11 = arith.constant 2.048000e+03 : f32
      %18 = arith.divf %17, %cst_11 : f32
      %c0_12 = arith.constant 0 : index
      %c0_13 = arith.constant 0 : index
      %19 = memref.load %arg2[%c0_12, %c0_13] : memref<1x1xf32, #tpu.memory_space<smem>>
      memref.store %18, %arg2[%c0_12, %c0_13] : memref<1x1xf32, #tpu.memory_space<smem>>
    } else {
    }
    return
  }
  func.func @transform_0(%arg0: i32) -> (i32, i32) {
    %c0_i32 = arith.constant 0 : i32
    %c0_i32_0 = arith.constant 0 : i32
    return %arg0, %c0_i32 : i32, i32
  }
  func.func @transform_1(%arg0: i32) -> (i32, i32) {
    %c0_i32 = arith.constant 0 : i32
    %c0_i32_0 = arith.constant 0 : i32
    %c0_i32_1 = arith.constant 0 : i32
    return %c0_i32, %c0_i32_0 : i32, i32
  }
}

</mosaic_0001>

<llo_original>
// kernel: tpu_custom_call.1
$region0: #{tpu_custom_call.1}
  #allocation0 [shape = 'u32[]', space=smem, size = 0x4, offset = 0x4, fixed_abs, tag = 'smem constant byte address 0x4 - core index']
  #allocation1 [shape = 'u32[144,128]{1,0:T(1,128)}', space=vmem, size = 0x12000, scoped, tag = 'internal scratch']
  #allocation2 [shape = 'f32[16,128]{1,0:T(8,128)}', space=vmem, size = 0x2000, scoped, tag = 'scratch operand']
  %s0 = inlined_call_operand.hbm [shape: f32[16,128], index: 0, kind: input, shape index: {}]
  %s1 = inlined_call_operand.hbm [shape: f32[1,1], index: 1, kind: output, shape index: {}]
  %s2 = sld [smem:[#allocation0]]
  $region26: #{tpu_custom_call.1} parent=0
    _
  %s4 = ssub.s32 1, %s2
  %s5 = scalar_select 0, %s4, %s2
  $region1: #{tpu_custom_call.1} parent=0
    #allocation3 [shape = 'u8[8192]{0}', space=vmem, size = 0x2000, scoped, tag = 'input window, operand 0, single buffered']
    #allocation4 [shape = 's32[1]{0}', space=sflag, size = 0x4, scoped, tag = 'scoped memory for tpu_custom_call.1']
    #allocation5 [shape = 's32[1]{0}', space=sflag, size = 0x4, scoped, tag = 'scoped memory for tpu_custom_call.1']
    #allocation6 [shape = 'u8[512]{0}', space=smem, size = 0x200, scoped, tag = 'output window, operand 0, single buffered']
    %6 = vsyncpa [#allocation4], 0
    %7 = vsyncpa [#allocation5], 0
    // Predicated region
    $region2: #{tpu_custom_call.1} parent=1 // pred_check
      _
    $region3: #{tpu_custom_call.1} parent=1 // pred_check_branch
      %9 = sbr.rel (0) target = $region5
    $region4: #{tpu_custom_call.1} parent=1 // pred_region
      %s11 = ssub.s32 256, 256
      %12 = vsyncadd [#allocation4], %s11
      %s13 = sshll.u32 [#allocation3], 4
      %s14 = int_to_ptr.vmem [resolvable:$true] %s13
      %19 = dma.hbm_to_vmem [thread:$0]  %s0, 256, %s14, [#allocation4], 128, 128, 8
    $region5: #{tpu_custom_call.1} parent=1 // pred_fallthru
      _
    // Predicated region
    $region6: #{tpu_custom_call.1} parent=1 // pred_check
      _
    $region7: #{tpu_custom_call.1} parent=1 // pred_check_branch
      %21 = sbr.rel (0) target = $region9
    $region8: #{tpu_custom_call.1} parent=1 // pred_region
      %22 = dma.done [#allocation4], 256
    $region9: #{tpu_custom_call.1} parent=1 // pred_fallthru
      _
    %p23 = scmp.eq.s32.totalorder 0, 0
    // Predicated region
    $region10: #{tpu_custom_call.1} parent=1 // pred_check
      %p24 = pneg %p23
    $region11: #{tpu_custom_call.1} parent=1 // pred_check_branch
      %26 = sbr.rel (%p24) target = $region13
    $region12: #{tpu_custom_call.1} parent=1 // pred_region
      %27 = vst [vmem:[#allocation2] sm:$0xff] 0.0
      %28 = vst [vmem:[#allocation2 + $0x8] sm:$0xff] 0.0
    $region13: #{tpu_custom_call.1} parent=1 // pred_fallthru
      _
    %v29 = vld [vmem:[#allocation3] sm:$0xff]
    %v30 = vld [vmem:[#allocation3 + $0x8] sm:$0xff]
    %v31 = vsub.f32 %v29, 1.0
    %v32 = vsub.f32 %v30, 1.0
    %v33 = vld [vmem:[#allocation2] sm:$0xff]
    %v34 = vld [vmem:[#allocation2 + $0x8] sm:$0xff]
    %v35 = vmul.f32 %v31, %v31
    %v36 = vmul.f32 %v32, %v32
    %v37 = vadd.f32 %v33, %v35
    %v38 = vadd.f32 %v34, %v36
    %39 = vst [vmem:[#allocation2] sm:$0xff] %v37
    %40 = vst [vmem:[#allocation2 + $0x8] sm:$0xff] %v38
    // Predicated region
    $region14: #{tpu_custom_call.1} parent=1 // pred_check
      %p41 = pneg %p23
    $region15: #{tpu_custom_call.1} parent=1 // pred_check_branch
      %43 = sbr.rel (%p41) target = $region17
    $region16: #{tpu_custom_call.1} parent=1 // pred_region
      %v44 = vld [vmem:[#allocation2] sm:$0xff]
      %v45 = vld [vmem:[#allocation2 + $0x8] sm:$0xff]
      %v46 = vadd.f32 %v44, %v45
      %47 = vadd.xlane.f32.xlu0 %v46
      %v48 = vpop.xlane.xlu0 %47
      %v49 = vrot.slane %v48, 4
      %v50 = vadd.f32 %v48, %v49
      %v51 = vrot.slane %v50, 2
      %v52 = vadd.f32 %v50, %v51
      %v53 = vrot.slane %v52, 1
      %v54 = vadd.f32 %v52, %v53
      %s55 = vtos %v54
      %v56 = vrcp.pop 2048.0
      %s57 = vtos %v56
      %s58 = smul.f32 %s55, %s57
      %s59 = scalar_lea.smem [#allocation6], 0
      %60 = sst [smem:[%s59]] %s58
    $region17: #{tpu_custom_call.1} parent=1 // pred_fallthru
      _
    // Predicated region
    $region18: #{tpu_custom_call.1} parent=1 // pred_check
      _
    $region19: #{tpu_custom_call.1} parent=1 // pred_check_branch
      %62 = sbr.rel (0) target = $region21
    $region20: #{tpu_custom_call.1} parent=1 // pred_region
      %s64 = ssub.s32 16, 16
      %65 = vsyncadd [#allocation5], %s64
      %68 = dma.smem_to_hbm [#allocation6], 16, %s1, [#allocation5]
    $region21: #{tpu_custom_call.1} parent=1 // pred_fallthru
      _
    // Predicated region
    $region22: #{tpu_custom_call.1} parent=1 // pred_check
      _
    $region23: #{tpu_custom_call.1} parent=1 // pred_check_branch
      %70 = sbr.rel (0) target = $region25
    $region24: #{tpu_custom_call.1} parent=1 // pred_region
      %71 = dma.done [#allocation5], 16
    $region25: #{tpu_custom_call.1} parent=1 // pred_fallthru
      _
    %72 = sfence
    %73 = vsyncpa [#allocation4], 1
    %74 = vsyncpa [#allocation5], 1

</llo_original>
